<compile_context>
chip_gen: v7x
topology: tpu7x:2x2x1
jax: 0.10.0
libtpu: 0.0.40
codegen_flags: <defaults>
</compile_context>

<pallas_src>
import functools

import jax
import jax.numpy as jnp
from jax.experimental import pallas as pl
from jax.experimental.pallas import tpu as pltpu


def _pick_tile(n, align, max_tile):
    """Largest tile dividing n that is a multiple of `align` and <= max_tile.
    Falls back to the full extent n (always a legal full-dim block)."""
    if n <= max_tile:
        return n
    t = (max_tile // align) * align
    while t >= align:
        if n % t == 0:
            return t
        t -= align
    return n


def _tpu_generation():
    try:
        kind = jax.devices()[0].device_kind.lower()
    except Exception:
        return None
    if "v5" in kind:
        return "v5e"
    if "v6" in kind:
        return "v6e"
    if "v7" in kind or "7x" in kind:
        return "v7x"
    return None


def _default_tiles(gen):
    # (max_t_tile, max_d_tile)
    if gen == "v5e":
        return 128, 2048   # 128x128 MXU: halve f32 matmul work per element
    if gen == "v6e":
        return 256, 2048   # 256x256 MXU, 128 MiB VMEM: big lane-dense tiles
    if gen == "v7x":
        return 256, 1024   # 64 MiB VMEM per TC: keep double-buffering intact
    return 256, 1024


def _vmem_limit_bytes(gen, tk, td, in_itemsize, out_itemsize, bidirection,
                      fused_reduce, use_bf16):
    n_in = 4 if bidirection else 2
    est = n_in * 2 * tk * td * in_itemsize                       # dbl-buf inputs
    est += (2 if bidirection else 1) * 2 * tk * tk * (2 if use_bf16 else 4)
    if fused_reduce:
        est += 2 * td * 4
    else:
        est += 2 * tk * td * out_itemsize
    est += (2 if bidirection else 1) * td * 4                    # carries
    est = int(est * 1.5) + (4 << 20)                             # temporaries
    cap = (96 << 20) if gen in ("v5e", "v6e") else (48 << 20)    # v7x: 64 MiB phys
    return int(min(max(est, 32 << 20), cap))


def _cumul_loss_kernel(*refs, norm, bidirection, fused_reduce, tk, use_bf16):
    if bidirection:
        (mask_f_ref, mask_r_ref, out_f, lab_f, out_r, lab_r,
         loss_ref, carry_f, carry_r) = refs
    else:
        mask_f_ref, out_f, lab_f, loss_ref, carry_f = refs
        mask_r_ref = out_r = lab_r = carry_r = None

    k = pl.program_id(2)

    @pl.when(k == 0)
    def _init():
        carry_f[...] = jnp.zeros_like(carry_f)
        if bidirection:
            carry_r[...] = jnp.zeros_like(carry_r)
        if fused_reduce:
            loss_ref[...] = jnp.zeros_like(loss_ref)

    def chunk_matmul(mask, d):
        if use_bf16:
            # 0/1 mask is exactly representable in bf16; split d into hi/lo
            # halves and accumulate both MXU passes in f32.
            d_hi = d.astype(jnp.bfloat16)
            d_lo = (d - d_hi.astype(jnp.float32)).astype(jnp.bfloat16)
            return (jnp.dot(mask, d_hi, preferred_element_type=jnp.float32)
                    + jnp.dot(mask, d_lo, preferred_element_type=jnp.float32))
        return jnp.dot(mask, d, preferred_element_type=jnp.float32)

    def elem(c):
        return jnp.abs(c) if norm == "mae" else c * c

    # Forward chunk: cumsum(out - lab) within chunk + carry of previous chunks.
    d_f = out_f[0].astype(jnp.float32) - lab_f[0].astype(jnp.float32)  # (TK,TD)
    cum_f = carry_f[...] + chunk_matmul(mask_f_ref[...], d_f)
    loss = elem(cum_f)

    if bidirection:
        # Reversed direction: output chunk k consumes mirrored input chunk
        # nk-1-k (fetched by the reverse BlockSpec) plus its own suffix carry.
        d_r = out_r[0].astype(jnp.float32) - lab_r[0].astype(jnp.float32)
        cum_r = carry_r[...] + chunk_matmul(mask_r_ref[...], d_r)
        loss = loss + elem(cum_r)

    if fused_reduce:
        # Lane-dense (1, TD) partial accumulated in the resident output block;
        # the tiny cross-lane collapse happens once in the wrapper.
        part = jnp.sum(loss, axis=0, keepdims=True)
        loss_ref[...] = loss_ref[...] + part[None, None]
    else:
        loss_ref[0] = loss.astype(loss_ref.dtype)

    # Carry update AFTER use: the last row of the chunk cumsum already equals
    # old_carry + chunk column-sum (no extra column reduction needed).
    carry_f[...] = cum_f[tk - 1:tk, :]
    if bidirection:
        carry_r[...] = cum_r[tk - 1:tk, :]


def cumul_loss(outputs, labels, *, reduction="none", bidirection=False,
               norm="MAE", use_bf16_matmul=False,
               max_t_tile=None, max_d_tile=None):
    """Pallas TPU implementation of CumulLoss.forward.

    outputs, labels: (B, T, D). cumsum over axis 1 (T), then elementwise L1/L2
    between the cumulative sums (plus the reversed-direction term when
    bidirection=True), with 'none'/'mean'/'sum' reduction.
    """
    norm = norm.lower()
    if norm not in ("mae", "mse"):
        raise ValueError("Unsupported norm type. Use 'MAE' or 'MSE'.")
    if reduction not in ("none", "mean", "sum"):
        raise ValueError(f"Unsupported reduction: {reduction}")
    assert outputs.shape == labels.shape and outputs.ndim == 3
    B, T, D = outputs.shape

    gen = _tpu_generation()
    def_tk, def_td = _default_tiles(gen)
    if max_t_tile is None:
        max_t_tile = def_tk
    if max_d_tile is None:
        max_d_tile = def_td

    # Pad the feature dim to a lane-dense multiple of 128.  Zero padding of
    # both operands contributes exactly zero loss, so 'mean'/'sum' stay exact.
    d_pad = -(-D // 128) * 128
    if d_pad != D:
        pad = ((0, 0), (0, 0), (0, d_pad - D))
        outputs_p = jnp.pad(outputs, pad)
        labels_p = jnp.pad(labels, pad)
    else:
        outputs_p, labels_p = outputs, labels

    tk = _pick_tile(T, 8, max_t_tile)
    # v7x has 2 TensorCores sharded over the 'parallel' grid axes (B, nd):
    # when B == 1 prefer nd >= 2 so both cores get work.
    eff_max_d = max_d_tile
    if gen == "v7x" and B == 1 and d_pad >= 256:
        eff_max_d = min(eff_max_d, d_pad // 2)
    td = _pick_tile(d_pad, 128, eff_max_d)
    nk = T // tk
    nd = d_pad // td

    fused_reduce = reduction != "none"
    out_dtype = jnp.result_type(outputs.dtype, labels.dtype)
    if not jnp.issubdtype(out_dtype, jnp.floating):
        out_dtype = jnp.float32

    # Loop-invariant triangular matrices: tiny resident inputs (DMA'd once).
    mask_dtype = jnp.bfloat16 if use_bf16_matmul else jnp.float32
    idx = jnp.arange(tk, dtype=jnp.int32)
    mask_f = (idx[None, :] <= idx[:, None]).astype(mask_dtype)
    mask_spec = pl.BlockSpec((tk, tk), lambda b, dt, k: (0, 0))
    operands = [mask_f]
    in_specs = [mask_spec]
    if bidirection:
        mask_r = (idx[None, :] >= (tk - 1) - idx[:, None]).astype(mask_dtype)
        operands.append(mask_r)
        in_specs.append(mask_spec)

    fwd_spec = pl.BlockSpec((1, tk, td), lambda b, dt, k: (b, k, dt))
    in_specs += [fwd_spec, fwd_spec]           # outputs, labels (forward chunks)
    operands += [outputs_p, labels_p]
    if bidirection:
        rev_spec = pl.BlockSpec((1, tk, td),
                                lambda b, dt, k: (b, nk - 1 - k, dt))
        in_specs += [rev_spec, rev_spec]       # mirrored chunks for reverse term
        operands += [outputs_p, labels_p]

    scratch = [pltpu.VMEM((1, td), jnp.float32)]          # forward carry
    if bidirection:
        scratch.append(pltpu.VMEM((1, td), jnp.float32))  # reverse carry

    if fused_reduce:
        # One lane-dense (1, td) partial-sum tile per (batch, D-tile).
        out_shape = jax.ShapeDtypeStruct((B, nd, 1, td), jnp.float32)
        out_spec = pl.BlockSpec((1, 1, 1, td), lambda b, dt, k: (b, dt, 0, 0))
    else:
        out_shape = jax.ShapeDtypeStruct((B, T, d_pad), out_dtype)
        out_spec = pl.BlockSpec((1, tk, td), lambda b, dt, k: (b, k, dt))

    kernel = functools.partial(
        _cumul_loss_kernel, norm=norm, bidirection=bidirection,
        fused_reduce=fused_reduce, tk=tk, use_bf16=use_bf16_matmul)

    vmem_limit = _vmem_limit_bytes(
        gen, tk, td, jnp.dtype(outputs.dtype).itemsize,
        jnp.dtype(out_dtype).itemsize, bidirection, fused_reduce,
        use_bf16_matmul)

    result = pl.pallas_call(
        kernel,
        out_shape=out_shape,
        grid_spec=pltpu.PrefetchScalarGridSpec(
            num_scalar_prefetch=0,
            grid=(B, nd, nk),          # k (reduction/carry axis) innermost
            in_specs=in_specs,
            out_specs=out_spec,
            scratch_shapes=scratch),
        compiler_params=pltpu.CompilerParams(
            dimension_semantics=("parallel", "parallel", "arbitrary"),
            vmem_limit_bytes=vmem_limit),
    )(*operands)

    if reduction == "none":
        return result if d_pad == D else result[:, :, :D]
    total = jnp.sum(result)               # tiny (B, nd, 1, td) partials
    if reduction == "sum":
        return total
    return total / (B * T * D)            # 'mean'


def _reference(outputs, labels, *, reduction="none", bidirection=False,
               norm="MAE"):
    def elem(a, b):
        return jnp.abs(a - b) if norm.lower() == "mae" else (a - b) ** 2
    loss = elem(jnp.cumsum(outputs, axis=1), jnp.cumsum(labels, axis=1))
    if bidirection:
        loss = loss + elem(jnp.cumsum(outputs[:, ::-1], axis=1),
                           jnp.cumsum(labels[:, ::-1], axis=1))
    if reduction == "mean":
        return jnp.mean(loss)
    if reduction == "sum":
        return jnp.sum(loss)
    return loss


if __name__ == "__main__":
    key = jax.random.PRNGKey(0)
    k1, k2 = jax.random.split(key)
    B, T, D = 2, 8, 128
    outputs = jax.random.normal(k1, (B, T, D), dtype=jnp.float32)
    labels = jax.random.normal(k2, (B, T, D), dtype=jnp.float32)

    # Default configuration: reduction='none', bidirection=False, norm='MAE'
    loss = cumul_loss(outputs, labels)
    jax.block_until_ready(loss)
    assert loss.shape == (B, T, D)
    assert jnp.allclose(loss, _reference(outputs, labels), atol=1e-5, rtol=1e-5)

    # Bidirectional / MSE, reduction='none'
    loss_bi = cumul_loss(outputs, labels, bidirection=True, norm="MSE")
    jax.block_until_ready(loss_bi)
    assert jnp.allclose(
        loss_bi, _reference(outputs, labels, bidirection=True, norm="MSE"),
        atol=1e-4, rtol=1e-4)

    # Fused in-kernel reduction path ('mean' and 'sum')
    loss_mean = cumul_loss(outputs, labels, reduction="mean")
    loss_sum = cumul_loss(outputs, labels, reduction="sum", bidirection=True)
    jax.block_until_ready((loss_mean, loss_sum))
    assert jnp.allclose(loss_mean,
                        _reference(outputs, labels, reduction="mean"),
                        atol=1e-5, rtol=1e-5)
    assert jnp.allclose(loss_sum,
                        _reference(outputs, labels, reduction="sum",
                                   bidirection=True),
                        atol=1e-3, rtol=1e-5)

    # Multi-chunk shape to exercise the T-carry, reverse-chunk and D tiling.
    B2, T2, D2 = 2, 32, 256
    o2 = jax.random.normal(jax.random.PRNGKey(1), (B2, T2, D2), jnp.float32)
    l2 = jax.random.normal(jax.random.PRNGKey(2), (B2, T2, D2), jnp.float32)
    got = cumul_loss(o2, l2, bidirection=True, norm="MAE",
                     max_t_tile=16, max_d_tile=128)
    jax.block_until_ready(got)
    assert jnp.allclose(got,
                        _reference(o2, l2, bidirection=True, norm="MAE"),
                        atol=1e-4, rtol=1e-4)

    # Non-128-multiple feature dim exercises the lane-padding path.
    B3, T3, D3 = 2, 8, 96
    o3 = jax.random.normal(jax.random.PRNGKey(3), (B3, T3, D3), jnp.float32)
    l3 = jax.random.normal(jax.random.PRNGKey(4), (B3, T3, D3), jnp.float32)
    got3 = cumul_loss(o3, l3, norm="MAE")
    got3_mean = cumul_loss(o3, l3, reduction="mean", bidirection=True)
    jax.block_until_ready((got3, got3_mean))
    assert got3.shape == (B3, T3, D3)
    assert jnp.allclose(got3, _reference(o3, l3), atol=1e-5, rtol=1e-5)
    assert jnp.allclose(got3_mean,
                        _reference(o3, l3, reduction="mean", bidirection=True),
                        atol=1e-5, rtol=1e-5)

    # Optional bf16 MXU operands (hi/lo split keeps ~16 mantissa bits).
    loss_bf16 = cumul_loss(outputs, labels, use_bf16_matmul=True)
    jax.block_until_ready(loss_bf16)
    assert jnp.allclose(loss_bf16, _reference(outputs, labels),
                        atol=1e-3, rtol=1e-3)

    print("KERNEL_OK")
</pallas_src>

<mosaic_0001>
module attributes {stable_mosaic.version = 11 : i64} {
  func.func @_cumul_loss_kernel(%arg0: i32, %arg1: i32, %arg2: i32, %arg3: memref<8x8xf32, #tpu.memory_space<vmem>>, %arg4: memref<1x8x128xf32, #tpu.memory_space<vmem>>, %arg5: memref<1x8x128xf32, #tpu.memory_space<vmem>>, %arg6: memref<1x8x128xf32, #tpu.memory_space<vmem>>, %arg7: memref<1x128xf32, #tpu.memory_space<vmem>>) attributes {dimension_semantics = [#tpu.dimension_semantics<parallel>, #tpu.dimension_semantics<parallel>, #tpu.dimension_semantics<arbitrary>], iteration_bounds = array<i64: 2, 1, 1>, scalar_prefetch = 0 : i64, scratch_operands = 1 : i64, tpu.core_type = #tpu.core_type<tc>, window_params = [{pipeline_mode = #tpu.pipeline_mode<synchronous>, transform_indices = @transform_0, window_bounds = array<i64: 8, 8>}, {transform_indices = @transform_1, window_bounds = array<i64: 1, 8, 128>}, {transform_indices = @transform_2, window_bounds = array<i64: 1, 8, 128>}, {transform_indices = @transform_3, window_bounds = array<i64: 1, 8, 128>}]} {
    %c0_i32 = arith.constant 0 : i32
    %0 = arith.cmpi eq, %arg2, %c0_i32 : i32
    %1 = arith.extui %0 : i1 to i32
    %c0_i32_0 = arith.constant 0 : i32
    %2 = arith.cmpi ne, %1, %c0_i32_0 : i32
    scf.if %2 {
      %cst_15 = arith.constant 0.000000e+00 : f32
      %19 = vector.broadcast %cst_15 : f32 to vector<1x128xf32>
      %c0_16 = arith.constant 0 : index
      %c0_17 = arith.constant 0 : index
      %20 = vector.load %arg7[%c0_16, %c0_17] : memref<1x128xf32, #tpu.memory_space<vmem>>, vector<1x128xf32>
      tpu.vector_store %arg7[%c0_16, %c0_17], %19 {strides = array<i32>} : memref<1x128xf32, #tpu.memory_space<vmem>>, vector<1x128xf32>,
    } else {
    }
    %c0 = arith.constant 0 : index
    %c0_1 = arith.constant 0 : index
    %c0_2 = arith.constant 0 : index
    %3 = vector.load %arg4[%c0, %c0_1, %c0_2] : memref<1x8x128xf32, #tpu.memory_space<vmem>>, vector<1x8x128xf32>
    %4 = vector.shape_cast %3 : vector<1x8x128xf32> to vector<8x128xf32>
    %c0_3 = arith.constant 0 : index
    %c0_4 = arith.constant 0 : index
    %c0_5 = arith.constant 0 : index
    %5 = vector.load %arg5[%c0_3, %c0_4, %c0_5] : memref<1x8x128xf32, #tpu.memory_space<vmem>>, vector<1x8x128xf32>
    %6 = vector.shape_cast %5 : vector<1x8x128xf32> to vector<8x128xf32>
    %7 = arith.subf %4, %6 : vector<8x128xf32>
    %c0_6 = arith.constant 0 : index
    %c0_7 = arith.constant 0 : index
    %8 = vector.load %arg7[%c0_6, %c0_7] : memref<1x128xf32, #tpu.memory_space<vmem>>, vector<1x128xf32>
    %c0_8 = arith.constant 0 : index
    %c0_9 = arith.constant 0 : index
    %9 = vector.load %arg3[%c0_8, %c0_9] : memref<8x8xf32, #tpu.memory_space<vmem>>, vector<8x8xf32>
    %cst = arith.constant dense<0.000000e+00> : vector<8x128xf32>
    %10 = tpu.matmul %9, %7, %cst {dimension_numbers = #tpu.dot_dimension_numbers<[1], [0], [0], [1], [0, 0, 1, 1], [], []>} : vector<8x8xf32>, vector<8x128xf32>, vector<8x128xf32> -> vector<8x128xf32>
    %11 = vector.broadcast %8 : vector<1x128xf32> to vector<8x128xf32>
    %12 = arith.addf %11, %10 : vector<8x128xf32>
    %13 = math.absf %12 : vector<8x128xf32>
    %c0_10 = arith.constant 0 : index
    %c0_11 = arith.constant 0 : index
    %c0_12 = arith.constant 0 : index
    %14 = vector.load %arg6[%c0_10, %c0_11, %c0_12] : memref<1x8x128xf32, #tpu.memory_space<vmem>>, vector<1x8x128xf32>
    %15 = vector.shape_cast %14 : vector<1x8x128xf32> to vector<8x128xf32>
    %16 = vector.shape_cast %13 : vector<8x128xf32> to vector<1x8x128xf32>
    tpu.vector_store %arg6[%c0_10, %c0_11, %c0_12], %16 {strides = array<i32>} : memref<1x8x128xf32, #tpu.memory_space<vmem>>, vector<1x8x128xf32>,
    %17 = vector.extract_strided_slice %12 {offsets = [7, 0], sizes = [1, 128], strides = [1, 1]} : vector<8x128xf32> to vector<1x128xf32>
    %c0_13 = arith.constant 0 : index
    %c0_14 = arith.constant 0 : index
    %18 = vector.load %arg7[%c0_13, %c0_14] : memref<1x128xf32, #tpu.memory_space<vmem>>, vector<1x128xf32>
    tpu.vector_store %arg7[%c0_13, %c0_14], %17 {strides = array<i32>} : memref<1x128xf32, #tpu.memory_space<vmem>>, vector<1x128xf32>,
    return
  }
  func.func @transform_0(%arg0: i32, %arg1: i32, %arg2: i32) -> (i32, i32) {
    %c0_i32 = arith.constant 0 : i32
    %c0_i32_0 = arith.constant 0 : i32
    %c0_i32_1 = arith.constant 0 : i32
    return %c0_i32, %c0_i32_0 : i32, i32
  }
  func.func @transform_1(%arg0: i32, %arg1: i32, %arg2: i32) -> (i32, i32, i32) {
    %c0_i32 = arith.constant 0 : i32
    return %arg0, %arg2, %arg1 : i32, i32, i32
  }
  func.func @transform_2(%arg0: i32, %arg1: i32, %arg2: i32) -> (i32, i32, i32) {
    %c0_i32 = arith.constant 0 : i32
    return %arg0, %arg2, %arg1 : i32, i32, i32
  }
  func.func @transform_3(%arg0: i32, %arg1: i32, %arg2: i32) -> (i32, i32, i32) {
    %c0_i32 = arith.constant 0 : i32
    return %arg0, %arg2, %arg1 : i32, i32, i32
  }
}

</mosaic_0001>

<llo_original>
// kernel: tpu_custom_call.1
$region0: #{tpu_custom_call.1}
  #allocation0 [shape = 'u32[]', space=smem, size = 0x4, offset = 0x4, fixed_abs, tag = 'smem constant byte address 0x4 - core index']
  #allocation1 [shape = 'u32[144,128]{1,0:T(1,128)}', space=vmem, size = 0x12000, scoped, tag = 'internal scratch']
  #allocation2 [shape = 'f32[1,128]{1,0:T(1,128)}', space=vmem, size = 0x200, scoped, tag = 'scratch operand']
  %s0 = inlined_call_operand.hbm [shape: f32[8,8], index: 0, kind: input, shape index: {}]
  %s1 = inlined_call_operand.hbm [shape: f32[2,8,128], index: 1, kind: input, shape index: {}]
  %s2 = inlined_call_operand.hbm [shape: f32[2,8,128], index: 2, kind: input, shape index: {}]
  %s3 = inlined_call_operand.hbm [shape: f32[2,8,128], index: 3, kind: output, shape index: {}]
  %s4 = sld [smem:[#allocation0]]
  $region61: #{tpu_custom_call.1} parent=0
    _
  %s6 = ssub.s32 1, %s4
  %s7 = scalar_select 0, %s6, %s4
  $region1: #{tpu_custom_call.1} parent=0
    #allocation3 [shape = 'u8[4096]{0}', space=vmem, size = 0x1000, scoped, tag = 'input window, operand 0, single buffered']
    #allocation4 [shape = 's32[2]{0}', space=sflag, size = 0x8, scoped, tag = 'scoped memory for tpu_custom_call.1']
    #allocation5 [shape = 's32[2]{0}', space=sflag, size = 0x8, scoped, tag = 'scoped memory for tpu_custom_call.1']
    #allocation6 [shape = 'u8[8192]{0}', space=vmem, size = 0x2000, scoped, tag = 'input window, operand 1']
    #allocation7 [shape = 's32[2]{0}', space=sflag, size = 0x8, scoped, tag = 'scoped memory for tpu_custom_call.1']
    #allocation8 [shape = 'u8[8192]{0}', space=vmem, size = 0x2000, scoped, tag = 'input window, operand 2']
    #allocation9 [shape = 'u8[8192]{0}', space=vmem, size = 0x2000, scoped, tag = 'output window, operand 0']
    %8 = vsyncpa [#allocation4], 0
    %9 = vsyncpa [#allocation7], 0
    %s10 = scalar_lea.sflag [#allocation7], 1
    %11 = vsyncpa %s10, 0
    %12 = vsyncpa [#allocation5], 0
    %s13 = scalar_lea.sflag [#allocation5], 1
    %14 = vsyncpa %s13, 0
    loop: start=0, step=1, limit=4
    $region2: #{tpu_custom_call.1} parent=1 // loop_pre_header
      _
    $region3: #{tpu_custom_call.1} parent=1 // loop_header
      %s16 = sphi 0, %s20
      %p17 = scmp.ge.s32.totalorder %s16, 4
      %s23 = sphi 0, %s42
      %s24 = sphi 0, %s38
      %s25 = sphi 0, %s34
      %s26 = sphi 0, %s23
      %s27 = sphi 0, %s24
      %s28 = sphi 0, %s25
      %s29 = sphi 0, %s26
      %s30 = sphi 0, %s27
      %s31 = sphi 0, %s28
      %s43 = sphi 0, %s43
      %s45 = sphi 0, %s43
      %s46 = sphi 0, %s45
      %s60 = sphi 0, %s46
      %s70 = sphi 0, %s72
      %s73 = sphi 0, %s70
      %s74 = sphi 0, %s73
      %s90 = sphi 0, %s74
      %s100 = sphi 0, %s102
      %s103 = sphi 0, %s100
      %s104 = sphi 0, %s103
      %s120 = sphi 0, %s104
      %s130 = sphi 0, %s132
      %s133 = sphi 0, %s130
      %s134 = sphi 0, %s133
      %s150 = sphi 0, %s134
    $region4: #{tpu_custom_call.1} parent=1 // loop_header_branch
      %19 = sbr.rel (%p17) target = $region8
    $region5: #{tpu_custom_call.1} parent=1 // loop_body
      %s21 = ssub.s32 %s16, 1
      %s22 = ssub.s32 %s16, 2
      %s32 = sadd.s32 1, %s25
      %p33 = scmp.ge.s32.totalorder %s32, 1
      %s34 = scalar_select %p33, 0, %s32
      %s35 = sadd.s32 1, %s24
      %s36 = scalar_select %p33, %s35, %s24
      %p37 = scmp.ge.s32.totalorder %s36, 1
      %s38 = scalar_select %p37, 0, %s36
      %s39 = sadd.s32 1, %s23
      %s40 = scalar_select %p37, %s39, %s23
      %p41 = scmp.ge.s32.totalorder %s40, 2
      %s42 = scalar_select %p41, 0, %s40
      %s44 = sadd.s32 %s43, 1
      %p47 = scmp.eq.s32.totalorder %s16, 1
      %p48 = scmp.ne.s32.totalorder %s43, %s45
      %p49 = scmp.eq.s32.totalorder %s16, 0
      %p50 = por %p48, %p49
      %p51 = scmp.ne.s32.totalorder %s43, %s45
      %p52 = scmp.eq.s32.totalorder %s21, 1
      %p53 = por %p51, %p52
      %p54 = scmp.ne.s32.totalorder %s45, %s46
      %p55 = scmp.eq.s32.totalorder %s21, 0
      %p56 = por %p54, %p55
      %p57 = scmp.ne.s32.totalorder %s45, %s46
      %p58 = scmp.eq.s32.totalorder %s22, 1
      %p59 = por %p57, %p58
      %p61 = scmp.ne.s32.totalorder %s46, %s60
      %p62 = scmp.eq.s32.totalorder %s22, 0
      %p63 = por %p61, %p62
      %s64 = ssub.s32 %s23, %s42
      %s65 = ssub.s32 %s25, %s34
      %s66 = sor.u32 %s64, %s65
      %s67 = ssub.s32 %s24, %s38
      %s68 = sor.u32 %s66, %s67
      %p69 = scmp.eq.s32.totalorder %s68, 0
      %s71 = sadd.s32 %s70, 1
      %s72 = scalar_select %p69, %s70, %s71
      %p75 = pneg %p69
      %p76 = scmp.eq.s32.totalorder %s16, 1
      %p77 = por %p75, %p76
      %p78 = scmp.ne.s32.totalorder %s70, %s73
      %p79 = scmp.eq.s32.totalorder %s16, 0
      %p80 = por %p78, %p79
      %p81 = scmp.ne.s32.totalorder %s70, %s73
      %p82 = scmp.eq.s32.totalorder %s21, 1
      %p83 = por %p81, %p82
      %p84 = scmp.ne.s32.totalorder %s73, %s74
      %p85 = scmp.eq.s32.totalorder %s21, 0
      %p86 = por %p84, %p85
      %p87 = scmp.ne.s32.totalorder %s73, %s74
      %p88 = scmp.eq.s32.totalorder %s22, 1
      %p89 = por %p87, %p88
      %p91 = scmp.ne.s32.totalorder %s74, %s90
      %p92 = scmp.eq.s32.totalorder %s22, 0
      %p93 = por %p91, %p92
      %s94 = ssub.s32 %s23, %s42
      %s95 = ssub.s32 %s25, %s34
      %s96 = sor.u32 %s94, %s95
      %s97 = ssub.s32 %s24, %s38
      %s98 = sor.u32 %s96, %s97
      %p99 = scmp.eq.s32.totalorder %s98, 0
      %s101 = sadd.s32 %s100, 1
      %s102 = scalar_select %p99, %s100, %s101
      %p105 = pneg %p99
      %p106 = scmp.eq.s32.totalorder %s16, 1
      %p107 = por %p105, %p106
      %p108 = scmp.ne.s32.totalorder %s100, %s103
      %p109 = scmp.eq.s32.totalorder %s16, 0
      %p110 = por %p108, %p109
      %p111 = scmp.ne.s32.totalorder %s100, %s103
      %p112 = scmp.eq.s32.totalorder %s21, 1
      %p113 = por %p111, %p112
      %p114 = scmp.ne.s32.totalorder %s103, %s104
      %p115 = scmp.eq.s32.totalorder %s21, 0
      %p116 = por %p114, %p115
      %p117 = scmp.ne.s32.totalorder %s103, %s104
      %p118 = scmp.eq.s32.totalorder %s22, 1
      %p119 = por %p117, %p118
      %p121 = scmp.ne.s32.totalorder %s104, %s120
      %p122 = scmp.eq.s32.totalorder %s22, 0
      %p123 = por %p121, %p122
      %s124 = ssub.s32 %s23, %s42
      %s125 = ssub.s32 %s25, %s34
      %s126 = sor.u32 %s124, %s125
      %s127 = ssub.s32 %s24, %s38
      %s128 = sor.u32 %s126, %s127
      %p129 = scmp.eq.s32.totalorder %s128, 0
      %s131 = sadd.s32 %s130, 1
      %s132 = scalar_select %p129, %s130, %s131
      %p135 = pneg %p129
      %p136 = scmp.eq.s32.totalorder %s16, 1
      %p137 = por %p135, %p136
      %p138 = scmp.ne.s32.totalorder %s130, %s133
      %p139 = scmp.eq.s32.totalorder %s16, 0
      %p140 = por %p138, %p139
      %p141 = scmp.ne.s32.totalorder %s130, %s133
      %p142 = scmp.eq.s32.totalorder %s21, 1
      %p143 = por %p141, %p142
      %p144 = scmp.ne.s32.totalorder %s133, %s134
      %p145 = scmp.eq.s32.totalorder %s21, 0
      %p146 = por %p144, %p145
      %p147 = scmp.ne.s32.totalorder %s133, %s134
      %p148 = scmp.eq.s32.totalorder %s22, 1
      %p149 = por %p147, %p148
      %p151 = scmp.ne.s32.totalorder %s134, %s150
      %p152 = scmp.eq.s32.totalorder %s22, 0
      %p153 = por %p151, %p152
      %p154 = scmp.le.s32.totalorder 1, %s16
      %p155 = scmp.lt.s32.totalorder %s16, 3
      %p156 = pnand %p154, %p155
      %p157 = pneg %p156
      // Predicated region
      $region9: #{tpu_custom_call.1} parent=5 // pred_check
        _
      $region10: #{tpu_custom_call.1} parent=5 // pred_check_branch
        %159 = sbr.rel (%p156) target = $region12
      $region11: #{tpu_custom_call.1} parent=5 // pred_region
        %s160 = ssub.s32 %s16, 1
        // Predicated region
        $region13: #{tpu_custom_call.1} parent=11 // pred_check
          %p161 = pneg %p56
        $region14: #{tpu_custom_call.1} parent=11 // pred_check_branch
          %163 = sbr.rel (%p161) target = $region16
        $region15: #{tpu_custom_call.1} parent=11 // pred_region
          %s165 = ssub.s32 128, 128
          %166 = vsyncadd [#allocation4], %s165
          %s168 = sshll.u32 [#allocation3], 4
          %s169 = int_to_ptr.vmem [resolvable:$true] %s168
          %171 = dma.hbm_to_vmem [thread:$0]  %s0, 128, %s169, [#allocation4]
        $region16: #{tpu_custom_call.1} parent=11 // pred_fallthru
          _
      $region12: #{tpu_custom_call.1} parent=5 // pred_fallthru
        _
      %p172 = scmp.lt.s32.totalorder %s16, 2
      // Predicated region
      $region17: #{tpu_custom_call.1} parent=5 // pred_check
        %p173 = pneg %p172
      $region18: #{tpu_custom_call.1} parent=5 // pred_check_branch
        %175 = sbr.rel (%p173) target = $region20
      $region19: #{tpu_custom_call.1} parent=5 // pred_region
        // Predicated region
        $region21: #{tpu_custom_call.1} parent=19 // pred_check
          %p176 = pneg %p80
        $region22: #{tpu_custom_call.1} parent=19 // pred_check_branch
          %178 = sbr.rel (%p176) target = $region24
        $region23: #{tpu_custom_call.1} parent=19 // pred_region
          %s179 = sand.u32 %s16, 1
          %s180 = scalar_lea.sflag [#allocation7], %s179
          %s181 = sand.u32 %s70, 1
          %s182 = smul.addr %s181, 8
          %s183 = scalar_lea.vmem [#allocation6], %s182
          %s185 = ssub.s32 128, 128
          %186 = vsyncadd %s180, %s185
          %s187 = sadd.s32 %s24, %s25
          %s188 = sadd.s32 %s187, %s23
          %s189 = smul.addr %s188, 128
          %s190 = scalar_lea.hbm %s1, %s189
          %s192 = sshll.u32 %s183, 4
          %s193 = int_to_ptr.vmem [resolvable:$true] %s192
          %195 = dma.hbm_to_vmem [thread:$0]  %s190, 128, %s193, %s180
        $region24: #{tpu_custom_call.1} parent=19 // pred_fallthru
          _
        // Predicated region
        $region25: #{tpu_custom_call.1} parent=19 // pred_check
          %p196 = pneg %p110
        $region26: #{tpu_custom_call.1} parent=19 // pred_check_branch
          %198 = sbr.rel (%p196) target = $region28
        $region27: #{tpu_custom_call.1} parent=19 // pred_region
          %s199 = sand.u32 %s16, 1
          %s200 = scalar_lea.sflag [#allocation7], %s199
          %s201 = sand.u32 %s100, 1
          %s202 = smul.addr %s201, 8
          %s203 = scalar_lea.vmem [#allocation8], %s202
          %s205 = ssub.s32 128, 128
          %206 = vsyncadd %s200, %s205
          %s207 = sadd.s32 %s24, %s25
          %s208 = sadd.s32 %s207, %s23
          %s209 = smul.addr %s208, 128
          %s210 = scalar_lea.hbm %s2, %s209
          %s212 = sshll.u32 %s203, 4
          %s213 = int_to_ptr.vmem [resolvable:$true] %s212
          %215 = dma.hbm_to_vmem [thread:$0]  %s210, 128, %s213, %s200
        $region28: #{tpu_custom_call.1} parent=19 // pred_fallthru
          _
      $region20: #{tpu_custom_call.1} parent=5 // pred_fallthru
        _
      %p216 = scmp.le.s32.totalorder 1, %s16
      %p217 = scmp.lt.s32.totalorder %s16, 3
      %p218 = pnand %p216, %p217
      %p219 = pneg %p218
      // Predicated region
      $region29: #{tpu_custom_call.1} parent=5 // pred_check
        _
      $region30: #{tpu_custom_call.1} parent=5 // pred_check_branch
        %221 = sbr.rel (%p218) target = $region32
      $region31: #{tpu_custom_call.1} parent=5 // pred_region
        %s222 = ssub.s32 %s16, 1
        // Predicated region
        $region33: #{tpu_custom_call.1} parent=31 // pred_check
          %p223 = pneg %p56
        $region34: #{tpu_custom_call.1} parent=31 // pred_check_branch
          %225 = sbr.rel (%p223) target = $region36
        $region35: #{tpu_custom_call.1} parent=31 // pred_region
          %226 = dma.done [#allocation4], 128
        $region36: #{tpu_custom_call.1} parent=31 // pred_fallthru
          _
        %s227 = sand.u32 %s21, 1
        %s228 = scalar_lea.sflag [#allocation7], %s227
        %s229 = sand.u32 %s73, 1
        %s230 = smul.addr %s229, 8
        %s231 = scalar_lea.vmem [#allocation6], %s230
        // Predicated region
        $region37: #{tpu_custom_call.1} parent=31 // pred_check
          %p232 = pneg %p86
        $region38: #{tpu_custom_call.1} parent=31 // pred_check_branch
          %234 = sbr.rel (%p232) target = $region40
        $region39: #{tpu_custom_call.1} parent=31 // pred_region
          %235 = dma.done %s228, 128
        $region40: #{tpu_custom_call.1} parent=31 // pred_fallthru
          _
        %s236 = sand.u32 %s21, 1
        %s237 = scalar_lea.sflag [#allocation7], %s236
        %s238 = sand.u32 %s103, 1
        %s239 = smul.addr %s238, 8
        %s240 = scalar_lea.vmem [#allocation8], %s239
        // Predicated region
        $region41: #{tpu_custom_call.1} parent=31 // pred_check
          %p241 = pneg %p116
        $region42: #{tpu_custom_call.1} parent=31 // pred_check_branch
          %243 = sbr.rel (%p241) target = $region44
        $region43: #{tpu_custom_call.1} parent=31 // pred_region
          %244 = dma.done %s237, 128
        $region44: #{tpu_custom_call.1} parent=31 // pred_fallthru
          _
        %p245 = pneg %p56
        %p246 = pneg %p53
        %s247 = sand.u32 %s21, 1
        %s248 = scalar_lea.sflag [#allocation7], %s247
        %s249 = sand.u32 %s73, 1
        %s250 = smul.addr %s249, 8
        %s251 = scalar_lea.vmem [#allocation6], %s250
        %p252 = pneg %p86
        %p253 = pneg %p83
        %s254 = sand.u32 %s21, 1
        %s255 = scalar_lea.sflag [#allocation7], %s254
        %s256 = sand.u32 %s103, 1
        %s257 = smul.addr %s256, 8
        %s258 = scalar_lea.vmem [#allocation8], %s257
        %p259 = pneg %p116
        %p260 = pneg %p113
        %p261 = pneg %p146
        %p262 = pneg %p143
        %s263 = sand.u32 %s133, 1
        %s264 = scalar_lea.sflag [#allocation5], %s263
        %s265 = sand.u32 %s133, 1
        %s266 = smul.addr %s265, 8
        %s267 = scalar_lea.vmem [#allocation9], %s266
        %p268 = scmp.eq.s32.totalorder %s28, 0
        // Predicated region
        $region45: #{tpu_custom_call.1} parent=31 // pred_check
          %p269 = pneg %p268
        $region46: #{tpu_custom_call.1} parent=31 // pred_check_branch
          %271 = sbr.rel (%p269) target = $region48
        $region47: #{tpu_custom_call.1} parent=31 // pred_region
          %272 = vst [vmem:[#allocation2] sm:$0x1] 0.0
        $region48: #{tpu_custom_call.1} parent=31 // pred_fallthru
          _
        %v273 = vld [vmem:[%s231] sm:$0xff]
        %v274 = vld [vmem:[%s240] sm:$0xff]
        %v275 = vsub.f32 %v273, %v274
        %v276 = vld [vmem:[#allocation2] sm:$0x1]
        %v277 = vld [vmem:[#allocation3] sm:$0xff]
        %vm278 = vcmask 64512
        %v280 = vsel %vm278, %v277, 0
        %282 = vmatprep.subr.mxu0 0.0
        %283 = vmatpush1.msra.mxu0 %v275
        %284 = vmatprep.subr.mxu0 0.0
        %285 = vmatpush1.msra.mxu0 0.0
        %286 = vmatprep.subr.mxu0 0.0
        %287 = vmatpush1.msra.mxu0 0.0
        %288 = vmatprep.subr.mxu0 0.0
        %289 = vmatpush1.msra.mxu0 0.0
        %290 = vmatprep.subr.mxu0 0.0
        %291 = vmatpush1.msra.mxu0 0.0
        %292 = vmatprep.subr.mxu0 0.0
        %293 = vmatpush1.msra.mxu0 0.0
        %294 = vmatprep.subr.mxu0 0.0
        %295 = vmatpush1.msra.mxu0 0.0
        %296 = vmatprep.subr.mxu0 0.0
        %297 = vmatpush1.msra.mxu0 0.0
        %298 = vmatprep.subr.mxu0 0.0
        %299 = vmatpush1.msra.mxu0 0.0
        %300 = vmatprep.subr.mxu0 0.0
        %301 = vmatpush1.msra.mxu0 0.0
        %302 = vmatprep.subr.mxu0 0.0
        %303 = vmatpush1.msra.mxu0 0.0
        %304 = vmatprep.subr.mxu0 0.0
        %305 = vmatpush1.msra.mxu0 0.0
        %306 = vmatprep.subr.mxu0 0.0
        %307 = vmatpush1.msra.mxu0 0.0
        %308 = vmatprep.subr.mxu0 0.0
        %309 = vmatpush1.msra.mxu0 0.0
        %310 = vmatprep.subr.mxu0 0.0
        %311 = vmatpush1.msra.mxu0 0.0
        %312 = vmatprep.subr.mxu0 0.0
        %313 = vmatpush1.msra.mxu0 0.0
        %314 = vmatprep.subr.mxu0 0.0
        %315 = vmatpush1.msra.mxu0 0.0
        %316 = vmatprep.subr.mxu0 0.0
        %317 = vmatpush1.msra.mxu0 0.0
        %318 = vmatprep.subr.mxu0 0.0
        %319 = vmatpush1.msra.mxu0 0.0
        %320 = vmatprep.subr.mxu0 0.0
        %321 = vmatpush1.msra.mxu0 0.0
        %322 = vmatprep.subr.mxu0 0.0
        %323 = vmatpush1.msra.mxu0 0.0
        %324 = vmatprep.subr.mxu0 0.0
        %325 = vmatpush1.msra.mxu0 0.0
        %326 = vmatprep.subr.mxu0 0.0
        %327 = vmatpush1.msra.mxu0 0.0
        %328 = vmatprep.subr.mxu0 0.0
        %329 = vmatpush1.msra.mxu0 0.0
        %330 = vmatprep.subr.mxu0 0.0
        %331 = vmatpush1.msra.mxu0 0.0
        %332 = vmatprep.subr.mxu0 0.0
        %333 = vmatpush1.msra.mxu0 0.0
        %334 = vmatprep.subr.mxu0 0.0
        %335 = vmatpush1.msra.mxu0 0.0
        %336 = vmatprep.subr.mxu0 0.0
        %337 = vmatpush1.msra.mxu0 0.0
        %338 = vmatprep.subr.mxu0 0.0
        %339 = vmatpush1.msra.mxu0 0.0
        %340 = vmatprep.subr.mxu0 0.0
        %341 = vmatpush1.msra.mxu0 0.0
        %342 = vmatprep.subr.mxu0 0.0
        %343 = vmatpush1.msra.mxu0 0.0
        %344 = vmatprep.subr.mxu0 0.0
        %345 = vmatpush1.msra.mxu0 0.0
        %346 = vmatprep.mubr.f32.mxu0 0.0
        %347 = vmatmul.mubr.f32.gmra.mrb[0].mxu0 %v280
        %v348 = vpop.f32.mrb[0].mxu0
        %v349 = vadd.f32 0.0, %v348
        %v350 = vpop.f32.mrb[0].mxu0
        %351 = vdwg.mxu0
        %v353 = vlaneseq
        %v354 = vshrl.u32 %v353, 7
        %v355 = vsub.s32 0, %v354
        %v356 = vrot.slane %v276, %v355
        %v358 = vadd.f32 %v356, %v349
        %v359 = vand.u32 2147483647, %v358
        %360 = vst [vmem:[%s267] sm:$0xff] %v359
        %361 = vst [vmem:[#allocation2 - $0x7] sm:$0x80] %v358
        %s362 = sand.u32 %s133, 1
        %s363 = scalar_lea.sflag [#allocation5], %s362
        %s364 = sand.u32 %s133, 1
        %s365 = smul.addr %s364, 8
        %s366 = scalar_lea.vmem [#allocation9], %s365
        // Predicated region
        $region49: #{tpu_custom_call.1} parent=31 // pred_check
          %p367 = pneg %p143
        $region50: #{tpu_custom_call.1} parent=31 // pred_check_branch
          %369 = sbr.rel (%p367) target = $region52
        $region51: #{tpu_custom_call.1} parent=31 // pred_region
          %s371 = ssub.s32 128, 128
          %372 = vsyncadd %s363, %s371
          %s373 = sadd.s32 %s27, %s28
          %s374 = sadd.s32 %s373, %s26
          %s375 = smul.addr %s374, 128
          %s376 = scalar_lea.hbm %s3, %s375
          %s378 = sshll.u32 %s366, 4
          %s379 = int_to_ptr.vmem [resolvable:$true] %s378
          %381 = dma.vmem_to_hbm [thread:$0]  %s379, 128, %s376, %s363
        $region52: #{tpu_custom_call.1} parent=31 // pred_fallthru
          _
      $region32: #{tpu_custom_call.1} parent=5 // pred_fallthru
        _
      %p382 = scmp.le.s32.totalorder 2, %s16
      // Predicated region
      $region53: #{tpu_custom_call.1} parent=5 // pred_check
        %p383 = pneg %p382
      $region54: #{tpu_custom_call.1} parent=5 // pred_check_branch
        %385 = sbr.rel (%p383) target = $region56
      $region55: #{tpu_custom_call.1} parent=5 // pred_region
        %s386 = ssub.s32 %s16, 2
        // Predicated region
        $region57: #{tpu_custom_call.1} parent=55 // pred_check
          %p387 = pneg %p149
        $region58: #{tpu_custom_call.1} parent=55 // pred_check_branch
          %389 = sbr.rel (%p387) target = $region60
        $region59: #{tpu_custom_call.1} parent=55 // pred_region
          %s390 = sand.u32 %s134, 1
          %s391 = scalar_lea.sflag [#allocation5], %s390
          %s392 = sand.u32 %s134, 1
          %s393 = smul.addr %s392, 8
          %s394 = scalar_lea.vmem [#allocation9], %s393
          %395 = dma.done %s391, 128
        $region60: #{tpu_custom_call.1} parent=55 // pred_fallthru
          _
      $region56: #{tpu_custom_call.1} parent=5 // pred_fallthru
        _
    $region6: #{tpu_custom_call.1} parent=1 // loop_footer
      %s20 = sadd.s32 1, %s16
    $region7: #{tpu_custom_call.1} parent=1 // loop_footer_branch
      %15 = sbr.rel target = $region3
    $region8: #{tpu_custom_call.1} parent=1 // loop_exit
      _
    %396 = vsyncpa [#allocation4], 1
    %s397 = scalar_lea.sflag [#allocation4], 1
    %398 = vsyncpa %s397, 1
    %399 = vsyncpa [#allocation7], 1
    %s400 = scalar_lea.sflag [#allocation7], 1
    %401 = vsyncpa %s400, 1
    %402 = vsyncpa [#allocation5], 1
    %s403 = scalar_lea.sflag [#allocation5], 1
    %404 = vsyncpa %s403, 1

</llo_original>
